<compile_context>
chip_gen: v5e
topology: v5e:2x2
jax: 0.10.0
libtpu: 0.0.40
codegen_flags: <defaults>
</compile_context>

<pallas_src>
import functools

import numpy as np
import jax
import jax.numpy as jnp
from jax.experimental import pallas as pl
from jax.experimental.pallas import tpu as pltpu


# ----------------------------------------------------------------------------
# Fixed "parameters": windowed DFT bases.
# ----------------------------------------------------------------------------
def _make_bases(n_fft):
    """Hann-windowed real/imag DFT bases, shape (n_bins, n_fft), torchaudio-normalized."""
    t = np.arange(n_fft, dtype=np.float64)
    win = 0.5 - 0.5 * np.cos(2.0 * np.pi * t / n_fft)      # torch.hann_window (periodic)
    norm = 1.0 / np.sqrt(np.sum(win * win))                 # normalized=True ("window")
    n_bins = n_fft // 2 + 1
    f = np.arange(n_bins, dtype=np.float64)
    ang = 2.0 * np.pi * np.outer(f, t) / n_fft               # (n_bins, n_fft)
    wr = (np.cos(ang) * win[None, :]) * norm
    wi = (np.sin(ang) * win[None, :]) * norm
    return wr, wi


def _frame_signal(x, n_fft, hop, n_frames):
    """(B, T) -> (B, n_frames, n_fft). Free reshape when hop == n_fft (overlap=0)."""
    B = x.shape[0]
    x = x.astype(jnp.float32)
    if hop == n_fft:
        return x[:, : n_frames * n_fft].reshape(B, n_frames, n_fft)
    # TODO(synk): for overlap > 0 this gather materializes a redundant framed copy
    # in HBM; a ds-indexed BlockSpec over the raw (B, T) signal would avoid it.
    idx = jnp.arange(n_frames)[:, None] * hop + jnp.arange(n_fft)[None, :]
    return x[:, idx]


def _choose_tiling(n_frames, frames_tile):
    """Frame tiling: 2 halves (dual-TC axis), each num_tiles_half tiles of f_tile.

    f_tile is a multiple of 128 (lane-aligned slice of the fused matmul result)
    and is shrunk toward the actual need so padding waste stays bounded.
    """
    frames_tile = max(128, (int(frames_tile) // 128) * 128)
    half = -(-n_frames // 2)                                  # ceil(n_frames / 2)
    num_tiles_half = -(-half // frames_tile)
    f_tile = min(frames_tile, ((-(-half // num_tiles_half) + 127) // 128) * 128)
    n_frames_pad = 2 * num_tiles_half * f_tile
    return f_tile, num_tiles_half, n_frames_pad


# ----------------------------------------------------------------------------
# Pallas kernel: one (half, batch, frame-tile) grid step.
# ----------------------------------------------------------------------------
def _sss_loss_kernel(basis_ref, x_ref, d2_ref, s2_ref, la_ref,
                     acc_d2, acc_s2, acc_la, *, bins_pad, f_tile, eps):
    # basis_ref : (2*bins_pad, n_fft)   fused [win*cos ; win*sin] DFT basis (zero-padded rows)
    # x_ref     : (2*f_tile, n_fft)     [true-frames ; pred-frames] for this tile
    # d2/s2/la_ref : (1, 1, 1)          per-(half,batch) outputs, resident across f
    # acc_*     : (bins_pad, f_tile)    f32 elementwise accumulators (VMEM scratch)
    f = pl.program_id(2)
    last = pl.num_programs(2) - 1

    @pl.when(f == 0)
    def _init():
        acc_d2[...] = jnp.zeros_like(acc_d2)
        acc_s2[...] = jnp.zeros_like(acc_s2)
        acc_la[...] = jnp.zeros_like(acc_la)
        d2_ref[...] = jnp.zeros_like(d2_ref)
        s2_ref[...] = jnp.zeros_like(s2_ref)
        la_ref[...] = jnp.zeros_like(la_ref)

    basis = basis_ref[...]                 # (2*bins_pad, n_fft)
    frames = x_ref[...]                    # (2*f_tile, n_fft)

    # One MXU matmul for both signals; frames end up on the 128-lane axis.
    spec = jnp.einsum("nk,fk->nf", basis, frames,
                      preferred_element_type=jnp.float32)    # (2*bins_pad, 2*f_tile)

    rt, it = spec[:bins_pad, :f_tile], spec[bins_pad:, :f_tile]
    rp, ip = spec[:bins_pad, f_tile:], spec[bins_pad:, f_tile:]

    s_true = jnp.sqrt(rt * rt + it * it) + eps       # (bins_pad, f_tile)
    s_pred = jnp.sqrt(rp * rp + ip * ip) + eps

    diff = s_true - s_pred
    summ = s_true + s_pred
    # Two EUP logs: padded frames/bins give s_true == s_pred == eps exactly, so
    # diff and (log s_true - log s_pred) are exactly zero -> no mask needed.
    dlog = jnp.log(s_true) - jnp.log(s_pred)

    acc_d2[...] += diff * diff
    acc_s2[...] += summ * summ
    acc_la[...] += jnp.abs(dlog)

    @pl.when(f == last)
    def _finalize():
        d2_ref[...] += jnp.sum(acc_d2[...])
        s2_ref[...] += jnp.sum(acc_s2[...])
        la_ref[...] += jnp.sum(acc_la[...])


# ----------------------------------------------------------------------------
# Wrapper.
# ----------------------------------------------------------------------------
def sss_loss(x_true, x_pred, *, n_fft=64, alpha=1.0, overlap=0.0, eps=1e-7,
             frames_tile=1024):
    hop = int(n_fft * (1 - overlap))
    B, T = x_true.shape
    n_frames = 1 + (T - n_fft) // hop          # center=False
    n_bins = n_fft // 2 + 1
    bins_pad = ((n_bins + 7) // 8) * 8         # sublane-aligned bins

    f_tile, num_tiles_half, n_frames_pad = _choose_tiling(n_frames, frames_tile)
    total_tiles = 2 * num_tiles_half

    xt = _frame_signal(x_true, n_fft, hop, n_frames)   # (B, n_frames, n_fft)
    xp = _frame_signal(x_pred, n_fft, hop, n_frames)
    if n_frames_pad != n_frames:
        pad = ((0, 0), (0, n_frames_pad - n_frames), (0, 0))
        xt = jnp.pad(xt, pad)
        xp = jnp.pad(xp, pad)
    # Single fused input: per frame-tile, f_tile true frames then f_tile pred
    # frames -> one DMA + one matmul per grid step (pad/reshape/concat fuse into
    # the single wrapper-side materialization that padding required anyway).
    xt = xt.reshape(B, total_tiles, f_tile, n_fft)
    xp = xp.reshape(B, total_tiles, f_tile, n_fft)
    x = jnp.concatenate([xt, xp], axis=2)              # (B, total_tiles, 2*f_tile, n_fft)

    wr, wi = _make_bases(n_fft)
    basis_np = np.zeros((2 * bins_pad, n_fft), dtype=np.float32)
    basis_np[:n_bins] = wr
    basis_np[bins_pad:bins_pad + n_bins] = wi
    basis = jnp.asarray(basis_np)

    kernel = functools.partial(
        _sss_loss_kernel, bins_pad=int(bins_pad), f_tile=int(f_tile), eps=float(eps))

    acc_spec = pl.BlockSpec((1, 1, 1), lambda h, b, f: (h * B + b, 0, 0))
    d2, s2, la = pl.pallas_call(
        kernel,
        grid=(2, B, num_tiles_half),
        in_specs=[
            # basis, resident across the whole grid
            pl.BlockSpec((2 * bins_pad, n_fft), lambda h, b, f: (0, 0)),
            # fused [true; pred] frame tile (leading dims squeezed away)
            pl.BlockSpec((None, None, 2 * f_tile, n_fft),
                         lambda h, b, f: (b, h * num_tiles_half + f, 0, 0)),
        ],
        out_specs=(acc_spec, acc_spec, acc_spec),
        out_shape=(jax.ShapeDtypeStruct((2 * B, 1, 1), jnp.float32),
                   jax.ShapeDtypeStruct((2 * B, 1, 1), jnp.float32),
                   jax.ShapeDtypeStruct((2 * B, 1, 1), jnp.float32)),
        scratch_shapes=[pltpu.VMEM((bins_pad, f_tile), jnp.float32)
                        for _ in range(3)],
        compiler_params=pltpu.CompilerParams(
            dimension_semantics=("parallel", "parallel", "arbitrary")),
    )(basis, x)

    # Trivial finalization in plain JAX (keeps the half/batch grid axes parallel).
    d2_b = d2.reshape(2, B).sum(axis=0)
    s2_b = s2.reshape(2, B).sum(axis=0)
    la_b = la.reshape(2, B).sum(axis=0)
    # Analytic correction: each zero-padded cell contributed exactly (2*eps)^2 to
    # the ||S_t + S_p||^2 sum (and exactly 0 to the other two sums).
    pad_cells = bins_pad * n_frames_pad - n_bins * n_frames
    s2_b = s2_b - float(pad_cells) * (2.0 * eps) ** 2

    converge = jnp.mean(jnp.sqrt(d2_b) / jnp.sqrt(s2_b))
    log_term = jnp.sum(la_b) / float(B * n_frames * n_bins)
    return converge + alpha * log_term


# ----------------------------------------------------------------------------
# Pure-JAX reference (identical math) for validation.
# ----------------------------------------------------------------------------
def sss_loss_ref(x_true, x_pred, *, n_fft=64, alpha=1.0, overlap=0.0, eps=1e-7):
    hop = int(n_fft * (1 - overlap))
    B, T = x_true.shape
    n_frames = 1 + (T - n_fft) // hop
    frames_t = _frame_signal(x_true, n_fft, hop, n_frames)
    frames_p = _frame_signal(x_pred, n_fft, hop, n_frames)
    wr, wi = _make_bases(n_fft)
    wr = jnp.asarray(wr.T, jnp.float32)   # (n_fft, n_bins)
    wi = jnp.asarray(wi.T, jnp.float32)

    def spec(fr):
        r = jnp.einsum("bnd,df->bnf", fr, wr, precision=jax.lax.Precision.HIGHEST)
        i = jnp.einsum("bnd,df->bnf", fr, wi, precision=jax.lax.Precision.HIGHEST)
        return jnp.sqrt(r * r + i * i) + eps

    s_t, s_p = spec(frames_t), spec(frames_p)
    num = jnp.sqrt(jnp.sum((s_t - s_p) ** 2, axis=(1, 2)))
    den = jnp.sqrt(jnp.sum((s_t + s_p) ** 2, axis=(1, 2)))
    converge = jnp.mean(num / den)
    log_term = jnp.mean(jnp.abs(jnp.log(s_t) - jnp.log(s_p)))
    return converge + alpha * log_term


if __name__ == "__main__":
    key = jax.random.PRNGKey(0)
    k1, k2, k3, k4, k5, k6 = jax.random.split(key, 6)

    # Tolerance: MXU kernel vs XLA reference use different matmul/accumulation
    # order for the windowed DFT, so exact bitwise match is not expected.
    def check(got, want):
        got = np.asarray(jax.block_until_ready(got))
        want = np.asarray(jax.block_until_ready(want))
        assert np.allclose(got, want, rtol=1e-3, atol=1e-6), (got, want)

    # Test 1: tiny shape (B=2, T=256, n_fft=64 -> 4 frames); heavy frame padding.
    B, T = 2, 256
    x_true = jax.random.normal(k1, (B, T), dtype=jnp.float32)
    x_pred = x_true + 0.1 * jax.random.normal(k2, (B, T), dtype=jnp.float32)
    check(sss_loss(x_true, x_pred, n_fft=64, alpha=1.0, overlap=0.0, eps=1e-7),
          sss_loss_ref(x_true, x_pred, n_fft=64, alpha=1.0, overlap=0.0, eps=1e-7))

    # Test 2: multi-tile accumulation path + frame-padding (600 frames,
    # frames_tile=128 -> 3 tiles per half, 168 padded frames).
    T2 = 64 * 600
    y_true = jax.random.normal(k3, (B, T2), dtype=jnp.float32)
    y_pred = y_true + 0.1 * jax.random.normal(k4, (B, T2), dtype=jnp.float32)
    check(sss_loss(y_true, y_pred, n_fft=64, frames_tile=128),
          sss_loss_ref(y_true, y_pred, n_fft=64))

    # Test 3: B=1 (odd-batch / dual-TC split path) with the full default
    # f_tile=1024 tile (2048 frames, no frame padding).
    T3 = 64 * 2048
    z_true = jax.random.normal(k5, (1, T3), dtype=jnp.float32)
    z_pred = z_true + 0.1 * jax.random.normal(k6, (1, T3), dtype=jnp.float32)
    check(sss_loss(z_true, z_pred, n_fft=64),
          sss_loss_ref(z_true, z_pred, n_fft=64))

    print("KERNEL_OK")
</pallas_src>

<mosaic_0001>
module attributes {stable_mosaic.version = 11 : i64} {
  func.func @_sss_loss_kernel(%arg0: i32, %arg1: i32, %arg2: i32, %arg3: memref<80x64xf32, #tpu.memory_space<vmem>>, %arg4: memref<1x1x256x64xf32, #tpu.memory_space<vmem>>, %arg5: memref<1x1x1xf32, #tpu.memory_space<vmem>>, %arg6: memref<1x1x1xf32, #tpu.memory_space<vmem>>, %arg7: memref<1x1x1xf32, #tpu.memory_space<vmem>>, %arg8: memref<40x128xf32, #tpu.memory_space<vmem>>, %arg9: memref<40x128xf32, #tpu.memory_space<vmem>>, %arg10: memref<40x128xf32, #tpu.memory_space<vmem>>) attributes {dimension_semantics = [#tpu.dimension_semantics<parallel>, #tpu.dimension_semantics<parallel>, #tpu.dimension_semantics<arbitrary>], iteration_bounds = array<i64: 2, 2, 1>, scalar_prefetch = 0 : i64, scratch_operands = 3 : i64, tpu.core_type = #tpu.core_type<tc>, window_params = [{pipeline_mode = #tpu.pipeline_mode<synchronous>, transform_indices = @transform_0, window_bounds = array<i64: 80, 64>}, {transform_indices = @transform_1, window_bounds = array<i64: 1, 1, 256, 64>}, {transform_indices = @transform_2, window_bounds = array<i64: 1, 1, 1>}, {transform_indices = @transform_3, window_bounds = array<i64: 1, 1, 1>}, {transform_indices = @transform_4, window_bounds = array<i64: 1, 1, 1>}]} {
    %c0_i32 = arith.constant 0 : i32
    %0 = arith.cmpi eq, %arg2, %c0_i32 : i32
    %1 = arith.extui %0 : i1 to i32
    %c0_i32_0 = arith.constant 0 : i32
    %2 = arith.cmpi ne, %1, %c0_i32_0 : i32
    scf.if %2 {
      %cst_22 = arith.constant 0.000000e+00 : f32
      %43 = vector.broadcast %cst_22 : f32 to vector<40x128xf32>
      %c0_23 = arith.constant 0 : index
      %c0_24 = arith.constant 0 : index
      %44 = vector.load %arg8[%c0_23, %c0_24] : memref<40x128xf32, #tpu.memory_space<vmem>>, vector<40x128xf32>
      tpu.vector_store %arg8[%c0_23, %c0_24], %43 {strides = array<i32>} : memref<40x128xf32, #tpu.memory_space<vmem>>, vector<40x128xf32>,
      %cst_25 = arith.constant 0.000000e+00 : f32
      %45 = vector.broadcast %cst_25 : f32 to vector<40x128xf32>
      %c0_26 = arith.constant 0 : index
      %c0_27 = arith.constant 0 : index
      %46 = vector.load %arg9[%c0_26, %c0_27] : memref<40x128xf32, #tpu.memory_space<vmem>>, vector<40x128xf32>
      tpu.vector_store %arg9[%c0_26, %c0_27], %45 {strides = array<i32>} : memref<40x128xf32, #tpu.memory_space<vmem>>, vector<40x128xf32>,
      %cst_28 = arith.constant 0.000000e+00 : f32
      %47 = vector.broadcast %cst_28 : f32 to vector<40x128xf32>
      %c0_29 = arith.constant 0 : index
      %c0_30 = arith.constant 0 : index
      %48 = vector.load %arg10[%c0_29, %c0_30] : memref<40x128xf32, #tpu.memory_space<vmem>>, vector<40x128xf32>
      tpu.vector_store %arg10[%c0_29, %c0_30], %47 {strides = array<i32>} : memref<40x128xf32, #tpu.memory_space<vmem>>, vector<40x128xf32>,
      %cst_31 = arith.constant 0.000000e+00 : f32
      %49 = vector.broadcast %cst_31 : f32 to vector<1x1x1xf32>
      %c0_32 = arith.constant 0 : index
      %c0_33 = arith.constant 0 : index
      %c0_34 = arith.constant 0 : index
      %50 = vector.load %arg5[%c0_32, %c0_33, %c0_34] : memref<1x1x1xf32, #tpu.memory_space<vmem>>, vector<1x1x1xf32>
      tpu.vector_store %arg5[%c0_32, %c0_33, %c0_34], %49 {strides = array<i32>} : memref<1x1x1xf32, #tpu.memory_space<vmem>>, vector<1x1x1xf32>,
      %cst_35 = arith.constant 0.000000e+00 : f32
      %51 = vector.broadcast %cst_35 : f32 to vector<1x1x1xf32>
      %c0_36 = arith.constant 0 : index
      %c0_37 = arith.constant 0 : index
      %c0_38 = arith.constant 0 : index
      %52 = vector.load %arg6[%c0_36, %c0_37, %c0_38] : memref<1x1x1xf32, #tpu.memory_space<vmem>>, vector<1x1x1xf32>
      tpu.vector_store %arg6[%c0_36, %c0_37, %c0_38], %51 {strides = array<i32>} : memref<1x1x1xf32, #tpu.memory_space<vmem>>, vector<1x1x1xf32>,
      %cst_39 = arith.constant 0.000000e+00 : f32
      %53 = vector.broadcast %cst_39 : f32 to vector<1x1x1xf32>
      %c0_40 = arith.constant 0 : index
      %c0_41 = arith.constant 0 : index
      %c0_42 = arith.constant 0 : index
      %54 = vector.load %arg7[%c0_40, %c0_41, %c0_42] : memref<1x1x1xf32, #tpu.memory_space<vmem>>, vector<1x1x1xf32>
      tpu.vector_store %arg7[%c0_40, %c0_41, %c0_42], %53 {strides = array<i32>} : memref<1x1x1xf32, #tpu.memory_space<vmem>>, vector<1x1x1xf32>,
    } else {
    }
    %c0 = arith.constant 0 : index
    %c0_1 = arith.constant 0 : index
    %3 = vector.load %arg3[%c0, %c0_1] : memref<80x64xf32, #tpu.memory_space<vmem>>, vector<80x64xf32>
    %c0_2 = arith.constant 0 : index
    %c0_3 = arith.constant 0 : index
    %c0_4 = arith.constant 0 : index
    %c0_5 = arith.constant 0 : index
    %4 = vector.load %arg4[%c0_2, %c0_3, %c0_4, %c0_5] : memref<1x1x256x64xf32, #tpu.memory_space<vmem>>, vector<1x1x256x64xf32>
    %5 = vector.shape_cast %4 : vector<1x1x256x64xf32> to vector<256x64xf32>
    "tpu.trace_start"() <{level = 10 : i32, message = "nk,fk->nf"}> : () -> ()
    %cst = arith.constant dense<0.000000e+00> : vector<80x256xf32>
    %6 = tpu.matmul %3, %5, %cst {dimension_numbers = #tpu.dot_dimension_numbers<[1], [1], [0], [0], [0, 0, 1, 0], [], []>} : vector<80x64xf32>, vector<256x64xf32>, vector<80x256xf32> -> vector<80x256xf32>
    "tpu.trace_stop"() : () -> ()
    %7 = vector.extract_strided_slice %6 {offsets = [0, 0], sizes = [40, 128], strides = [1, 1]} : vector<80x256xf32> to vector<40x128xf32>
    %8 = vector.extract_strided_slice %6 {offsets = [40, 0], sizes = [40, 128], strides = [1, 1]} : vector<80x256xf32> to vector<40x128xf32>
    %9 = vector.extract_strided_slice %6 {offsets = [0, 128], sizes = [40, 128], strides = [1, 1]} : vector<80x256xf32> to vector<40x128xf32>
    %10 = vector.extract_strided_slice %6 {offsets = [40, 128], sizes = [40, 128], strides = [1, 1]} : vector<80x256xf32> to vector<40x128xf32>
    %11 = arith.mulf %7, %7 : vector<40x128xf32>
    %12 = arith.mulf %8, %8 : vector<40x128xf32>
    %13 = arith.addf %11, %12 : vector<40x128xf32>
    %14 = math.sqrt %13 : vector<40x128xf32>
    %cst_6 = arith.constant 1.000000e-07 : f32
    %15 = vector.broadcast %cst_6 : f32 to vector<40x128xf32>
    %16 = arith.addf %14, %15 : vector<40x128xf32>
    %17 = arith.mulf %9, %9 : vector<40x128xf32>
    %18 = arith.mulf %10, %10 : vector<40x128xf32>
    %19 = arith.addf %17, %18 : vector<40x128xf32>
    %20 = math.sqrt %19 : vector<40x128xf32>
    %cst_7 = arith.constant 1.000000e-07 : f32
    %21 = vector.broadcast %cst_7 : f32 to vector<40x128xf32>
    %22 = arith.addf %20, %21 : vector<40x128xf32>
    %23 = arith.subf %16, %22 : vector<40x128xf32>
    %24 = arith.addf %16, %22 : vector<40x128xf32>
    %25 = math.log %16 : vector<40x128xf32>
    %26 = math.log %22 : vector<40x128xf32>
    %27 = arith.subf %25, %26 : vector<40x128xf32>
    %c0_8 = arith.constant 0 : index
    %c0_9 = arith.constant 0 : index
    %28 = vector.load %arg8[%c0_8, %c0_9] : memref<40x128xf32, #tpu.memory_space<vmem>>, vector<40x128xf32>
    %29 = arith.mulf %23, %23 : vector<40x128xf32>
    %30 = arith.addf %28, %29 : vector<40x128xf32>
    %c0_10 = arith.constant 0 : index
    %c0_11 = arith.constant 0 : index
    %31 = vector.load %arg8[%c0_10, %c0_11] : memref<40x128xf32, #tpu.memory_space<vmem>>, vector<40x128xf32>
    tpu.vector_store %arg8[%c0_10, %c0_11], %30 {strides = array<i32>} : memref<40x128xf32, #tpu.memory_space<vmem>>, vector<40x128xf32>,
    %c0_12 = arith.constant 0 : index
    %c0_13 = arith.constant 0 : index
    %32 = vector.load %arg9[%c0_12, %c0_13] : memref<40x128xf32, #tpu.memory_space<vmem>>, vector<40x128xf32>
    %33 = arith.mulf %24, %24 : vector<40x128xf32>
    %34 = arith.addf %32, %33 : vector<40x128xf32>
    %c0_14 = arith.constant 0 : index
    %c0_15 = arith.constant 0 : index
    %35 = vector.load %arg9[%c0_14, %c0_15] : memref<40x128xf32, #tpu.memory_space<vmem>>, vector<40x128xf32>
    tpu.vector_store %arg9[%c0_14, %c0_15], %34 {strides = array<i32>} : memref<40x128xf32, #tpu.memory_space<vmem>>, vector<40x128xf32>,
    %c0_16 = arith.constant 0 : index
    %c0_17 = arith.constant 0 : index
    %36 = vector.load %arg10[%c0_16, %c0_17] : memref<40x128xf32, #tpu.memory_space<vmem>>, vector<40x128xf32>
    %37 = math.absf %27 : vector<40x128xf32>
    %38 = arith.addf %36, %37 : vector<40x128xf32>
    %c0_18 = arith.constant 0 : index
    %c0_19 = arith.constant 0 : index
    %39 = vector.load %arg10[%c0_18, %c0_19] : memref<40x128xf32, #tpu.memory_space<vmem>>, vector<40x128xf32>
    tpu.vector_store %arg10[%c0_18, %c0_19], %38 {strides = array<i32>} : memref<40x128xf32, #tpu.memory_space<vmem>>, vector<40x128xf32>,
    %c0_i32_20 = arith.constant 0 : i32
    %40 = arith.cmpi eq, %arg2, %c0_i32_20 : i32
    %41 = arith.extui %40 : i1 to i32
    %c0_i32_21 = arith.constant 0 : i32
    %42 = arith.cmpi ne, %41, %c0_i32_21 : i32
    scf.if %42 {
      %c0_22 = arith.constant 0 : index
      %c0_23 = arith.constant 0 : index
      %c0_24 = arith.constant 0 : index
      %43 = vector.load %arg5[%c0_22, %c0_23, %c0_24] : memref<1x1x1xf32, #tpu.memory_space<vmem>>, vector<1x1x1xf32>
      %c0_25 = arith.constant 0 : index
      %c0_26 = arith.constant 0 : index
      %44 = vector.load %arg8[%c0_25, %c0_26] : memref<40x128xf32, #tpu.memory_space<vmem>>, vector<40x128xf32>
      %45 = vector.shape_cast %44 : vector<40x128xf32> to vector<1x40x128xf32>
      %cst_27 = arith.constant dense<0.000000e+00> : vector<1xf32>
      %46 = vector.multi_reduction <add>, %45, %cst_27 [1, 2] : vector<1x40x128xf32> to vector<1xf32>
      %47 = vector.shape_cast %46 : vector<1xf32> to vector<1x1x1xf32>
      %48 = vector.extract %47[0, 0, 0] : f32 from vector<1x1x1xf32>
      %49 = vector.broadcast %48 : f32 to vector<1x1x1xf32>
      %50 = arith.addf %43, %49 : vector<1x1x1xf32>
      %c0_28 = arith.constant 0 : index
      %c0_29 = arith.constant 0 : index
      %c0_30 = arith.constant 0 : index
      %51 = vector.load %arg5[%c0_28, %c0_29, %c0_30] : memref<1x1x1xf32, #tpu.memory_space<vmem>>, vector<1x1x1xf32>
      tpu.vector_store %arg5[%c0_28, %c0_29, %c0_30], %50 {strides = array<i32>} : memref<1x1x1xf32, #tpu.memory_space<vmem>>, vector<1x1x1xf32>,
      %c0_31 = arith.constant 0 : index
      %c0_32 = arith.constant 0 : index
      %c0_33 = arith.constant 0 : index
      %52 = vector.load %arg6[%c0_31, %c0_32, %c0_33] : memref<1x1x1xf32, #tpu.memory_space<vmem>>, vector<1x1x1xf32>
      %c0_34 = arith.constant 0 : index
      %c0_35 = arith.constant 0 : index
      %53 = vector.load %arg9[%c0_34, %c0_35] : memref<40x128xf32, #tpu.memory_space<vmem>>, vector<40x128xf32>
      %54 = vector.shape_cast %53 : vector<40x128xf32> to vector<1x40x128xf32>
      %cst_36 = arith.constant dense<0.000000e+00> : vector<1xf32>
      %55 = vector.multi_reduction <add>, %54, %cst_36 [1, 2] : vector<1x40x128xf32> to vector<1xf32>
      %56 = vector.shape_cast %55 : vector<1xf32> to vector<1x1x1xf32>
      %57 = vector.extract %56[0, 0, 0] : f32 from vector<1x1x1xf32>
      %58 = vector.broadcast %57 : f32 to vector<1x1x1xf32>
      %59 = arith.addf %52, %58 : vector<1x1x1xf32>
      %c0_37 = arith.constant 0 : index
      %c0_38 = arith.constant 0 : index
      %c0_39 = arith.constant 0 : index
      %60 = vector.load %arg6[%c0_37, %c0_38, %c0_39] : memref<1x1x1xf32, #tpu.memory_space<vmem>>, vector<1x1x1xf32>
      tpu.vector_store %arg6[%c0_37, %c0_38, %c0_39], %59 {strides = array<i32>} : memref<1x1x1xf32, #tpu.memory_space<vmem>>, vector<1x1x1xf32>,
      %c0_40 = arith.constant 0 : index
      %c0_41 = arith.constant 0 : index
      %c0_42 = arith.constant 0 : index
      %61 = vector.load %arg7[%c0_40, %c0_41, %c0_42] : memref<1x1x1xf32, #tpu.memory_space<vmem>>, vector<1x1x1xf32>
      %c0_43 = arith.constant 0 : index
      %c0_44 = arith.constant 0 : index
      %62 = vector.load %arg10[%c0_43, %c0_44] : memref<40x128xf32, #tpu.memory_space<vmem>>, vector<40x128xf32>
      %63 = vector.shape_cast %62 : vector<40x128xf32> to vector<1x40x128xf32>
      %cst_45 = arith.constant dense<0.000000e+00> : vector<1xf32>
      %64 = vector.multi_reduction <add>, %63, %cst_45 [1, 2] : vector<1x40x128xf32> to vector<1xf32>
      %65 = vector.shape_cast %64 : vector<1xf32> to vector<1x1x1xf32>
      %66 = vector.extract %65[0, 0, 0] : f32 from vector<1x1x1xf32>
      %67 = vector.broadcast %66 : f32 to vector<1x1x1xf32>
      %68 = arith.addf %61, %67 : vector<1x1x1xf32>
      %c0_46 = arith.constant 0 : index
      %c0_47 = arith.constant 0 : index
      %c0_48 = arith.constant 0 : index
      %69 = vector.load %arg7[%c0_46, %c0_47, %c0_48] : memref<1x1x1xf32, #tpu.memory_space<vmem>>, vector<1x1x1xf32>
      tpu.vector_store %arg7[%c0_46, %c0_47, %c0_48], %68 {strides = array<i32>} : memref<1x1x1xf32, #tpu.memory_space<vmem>>, vector<1x1x1xf32>,
    } else {
    }
    return
  }
  func.func @transform_0(%arg0: i32, %arg1: i32, %arg2: i32) -> (i32, i32) {
    %c0_i32 = arith.constant 0 : i32
    %c0_i32_0 = arith.constant 0 : i32
    %c0_i32_1 = arith.constant 0 : i32
    return %c0_i32, %c0_i32_0 : i32, i32
  }
  func.func @transform_1(%arg0: i32, %arg1: i32, %arg2: i32) -> (i32, i32, i32, i32) {
    %c1_i32 = arith.constant 1 : i32
    %0 = arith.muli %arg0, %c1_i32 : i32
    %1 = arith.addi %0, %arg2 : i32
    %c0_i32 = arith.constant 0 : i32
    %c0_i32_0 = arith.constant 0 : i32
    %c0_i32_1 = arith.constant 0 : i32
    return %arg1, %1, %c0_i32, %c0_i32_0 : i32, i32, i32, i32
  }
  func.func @transform_2(%arg0: i32, %arg1: i32, %arg2: i32) -> (i32, i32, i32) {
    %c2_i32 = arith.constant 2 : i32
    %0 = arith.muli %arg0, %c2_i32 : i32
    %1 = arith.addi %0, %arg1 : i32
    %c0_i32 = arith.constant 0 : i32
    %c0_i32_0 = arith.constant 0 : i32
    %c0_i32_1 = arith.constant 0 : i32
    return %1, %c0_i32, %c0_i32_0 : i32, i32, i32
  }
  func.func @transform_3(%arg0: i32, %arg1: i32, %arg2: i32) -> (i32, i32, i32) {
    %c2_i32 = arith.constant 2 : i32
    %0 = arith.muli %arg0, %c2_i32 : i32
    %1 = arith.addi %0, %arg1 : i32
    %c0_i32 = arith.constant 0 : i32
    %c0_i32_0 = arith.constant 0 : i32
    %c0_i32_1 = arith.constant 0 : i32
    return %1, %c0_i32, %c0_i32_0 : i32, i32, i32
  }
  func.func @transform_4(%arg0: i32, %arg1: i32, %arg2: i32) -> (i32, i32, i32) {
    %c2_i32 = arith.constant 2 : i32
    %0 = arith.muli %arg0, %c2_i32 : i32
    %1 = arith.addi %0, %arg1 : i32
    %c0_i32 = arith.constant 0 : i32
    %c0_i32_0 = arith.constant 0 : i32
    %c0_i32_1 = arith.constant 0 : i32
    return %1, %c0_i32, %c0_i32_0 : i32, i32, i32
  }
}

</mosaic_0001>

<llo_original>
// kernel: tpu_custom_call.1
$region0: #{tpu_custom_call.1}
  #allocation0 [shape = 'u32[]', space=smem, size = 0x4, offset = 0x4, fixed_abs, tag = 'smem constant byte address 0x4 - core index']
  #allocation1 [shape = 'u32[72,128]{1,0:T(1,128)}', space=vmem, size = 0x9000, scoped, tag = 'internal scratch']
  #allocation2 [shape = 'f32[40,128]{1,0:T(8,128)}', space=vmem, size = 0x5000, scoped, tag = 'scratch operand']
  #allocation3 [shape = 'f32[40,128]{1,0:T(8,128)}', space=vmem, size = 0x5000, scoped, tag = 'scratch operand']
  #allocation4 [shape = 'f32[40,128]{1,0:T(8,128)}', space=vmem, size = 0x5000, scoped, tag = 'scratch operand']
  %s0 = inlined_call_operand.vmem [shape: f32[80,64], index: 0, kind: input, shape index: {}]
  %s1 = inlined_call_operand.vmem [shape: f32[2,2,256,64], index: 1, kind: input, shape index: {}]
  %s2 = inlined_call_operand.vmem [shape: f32[4,1,1], index: 2, kind: output, shape index: {0}]
  %s3 = inlined_call_operand.vmem [shape: f32[4,1,1], index: 3, kind: output, shape index: {1}]
  %s4 = inlined_call_operand.vmem [shape: f32[4,1,1], index: 4, kind: output, shape index: {2}]
  %5 = xla_tuple %s2, %s3, %s4
  %s6 = sld [smem:[#allocation0]]
  $region65: #{tpu_custom_call.1} parent=0
    _
  %s8 = ssub.s32 1, %s6
  %s9 = scalar_select 0, %s8, %s6
  loop: start=0, step=1, limit=6
  $region2: #{tpu_custom_call.1} parent=0 // loop_pre_header
    _
  $region3: #{tpu_custom_call.1} parent=0 // loop_header
    %s11 = sphi 0, %s15
    %p12 = scmp.ge.s32.totalorder %s11, 6
    %s18 = sphi 0, %s37
    %s19 = sphi 0, %s33
    %s20 = sphi 0, %s29
    %s21 = sphi 0, %s18
    %s22 = sphi 0, %s19
    %s23 = sphi 0, %s20
    %s24 = sphi 0, %s21
    %s25 = sphi 0, %s22
    %s26 = sphi 0, %s23
    %s38 = sphi 0, %s38
    %s40 = sphi 0, %s38
    %s41 = sphi 0, %s40
    %s55 = sphi 0, %s41
    %s65 = sphi 0, %s67
    %s68 = sphi 0, %s65
    %s69 = sphi 0, %s68
    %s85 = sphi 0, %s69
    %s95 = sphi 0, %s97
    %s98 = sphi 0, %s95
    %s99 = sphi 0, %s98
    %s115 = sphi 0, %s99
    %s125 = sphi 0, %s127
    %s128 = sphi 0, %s125
    %s129 = sphi 0, %s128
    %s145 = sphi 0, %s129
    %s155 = sphi 0, %s157
    %s158 = sphi 0, %s155
    %s159 = sphi 0, %s158
    %s175 = sphi 0, %s159
  $region4: #{tpu_custom_call.1} parent=0 // loop_header_branch
    %14 = sbr.rel (%p12) target = $region8
  $region5: #{tpu_custom_call.1} parent=0 // loop_body
    %s16 = ssub.s32 %s11, 1
    %s17 = ssub.s32 %s11, 2
    %s27 = sadd.s32 1, %s20
    %p28 = scmp.ge.s32.totalorder %s27, 1
    %s29 = scalar_select %p28, 0, %s27
    %s30 = sadd.s32 1, %s19
    %s31 = scalar_select %p28, %s30, %s19
    %p32 = scmp.ge.s32.totalorder %s31, 2
    %s33 = scalar_select %p32, 0, %s31
    %s34 = sadd.s32 1, %s18
    %s35 = scalar_select %p32, %s34, %s18
    %p36 = scmp.ge.s32.totalorder %s35, 2
    %s37 = scalar_select %p36, 0, %s35
    %s39 = sadd.s32 %s38, 1
    %p42 = scmp.eq.s32.totalorder %s11, 3
    %p43 = scmp.ne.s32.totalorder %s38, %s40
    %p44 = scmp.eq.s32.totalorder %s11, 0
    %p45 = por %p43, %p44
    %p46 = scmp.ne.s32.totalorder %s38, %s40
    %p47 = scmp.eq.s32.totalorder %s16, 3
    %p48 = por %p46, %p47
    %p49 = scmp.ne.s32.totalorder %s40, %s41
    %p50 = scmp.eq.s32.totalorder %s16, 0
    %p51 = por %p49, %p50
    %p52 = scmp.ne.s32.totalorder %s40, %s41
    %p53 = scmp.eq.s32.totalorder %s17, 3
    %p54 = por %p52, %p53
    %p56 = scmp.ne.s32.totalorder %s41, %s55
    %p57 = scmp.eq.s32.totalorder %s17, 0
    %p58 = por %p56, %p57
    %s59 = sadd.s32 %s18, %s20
    %s60 = sadd.s32 %s37, %s29
    %s61 = ssub.s32 %s19, %s33
    %s62 = ssub.s32 %s59, %s60
    %s63 = sor.u32 %s61, %s62
    %p64 = scmp.eq.s32.totalorder %s63, 0
    %s66 = sadd.s32 %s65, 1
    %s67 = scalar_select %p64, %s65, %s66
    %p70 = pneg %p64
    %p71 = scmp.eq.s32.totalorder %s11, 3
    %p72 = por %p70, %p71
    %p73 = scmp.ne.s32.totalorder %s65, %s68
    %p74 = scmp.eq.s32.totalorder %s11, 0
    %p75 = por %p73, %p74
    %p76 = scmp.ne.s32.totalorder %s65, %s68
    %p77 = scmp.eq.s32.totalorder %s16, 3
    %p78 = por %p76, %p77
    %p79 = scmp.ne.s32.totalorder %s68, %s69
    %p80 = scmp.eq.s32.totalorder %s16, 0
    %p81 = por %p79, %p80
    %p82 = scmp.ne.s32.totalorder %s68, %s69
    %p83 = scmp.eq.s32.totalorder %s17, 3
    %p84 = por %p82, %p83
    %p86 = scmp.ne.s32.totalorder %s69, %s85
    %p87 = scmp.eq.s32.totalorder %s17, 0
    %p88 = por %p86, %p87
    %s89 = smul.u32 %s18, 2
    %s90 = sadd.s32 %s89, %s19
    %s91 = smul.u32 %s37, 2
    %s92 = sadd.s32 %s91, %s33
    %s93 = ssub.s32 %s90, %s92
    %p94 = scmp.eq.s32.totalorder %s93, 0
    %s96 = sadd.s32 %s95, 1
    %s97 = scalar_select %p94, %s95, %s96
    %p100 = pneg %p94
    %p101 = scmp.eq.s32.totalorder %s11, 3
    %p102 = por %p100, %p101
    %p103 = scmp.ne.s32.totalorder %s95, %s98
    %p104 = scmp.eq.s32.totalorder %s11, 0
    %p105 = por %p103, %p104
    %p106 = scmp.ne.s32.totalorder %s95, %s98
    %p107 = scmp.eq.s32.totalorder %s16, 3
    %p108 = por %p106, %p107
    %p109 = scmp.ne.s32.totalorder %s98, %s99
    %p110 = scmp.eq.s32.totalorder %s16, 0
    %p111 = por %p109, %p110
    %p112 = scmp.ne.s32.totalorder %s98, %s99
    %p113 = scmp.eq.s32.totalorder %s17, 3
    %p114 = por %p112, %p113
    %p116 = scmp.ne.s32.totalorder %s99, %s115
    %p117 = scmp.eq.s32.totalorder %s17, 0
    %p118 = por %p116, %p117
    %s119 = smul.u32 %s18, 2
    %s120 = sadd.s32 %s119, %s19
    %s121 = smul.u32 %s37, 2
    %s122 = sadd.s32 %s121, %s33
    %s123 = ssub.s32 %s120, %s122
    %p124 = scmp.eq.s32.totalorder %s123, 0
    %s126 = sadd.s32 %s125, 1
    %s127 = scalar_select %p124, %s125, %s126
    %p130 = pneg %p124
    %p131 = scmp.eq.s32.totalorder %s11, 3
    %p132 = por %p130, %p131
    %p133 = scmp.ne.s32.totalorder %s125, %s128
    %p134 = scmp.eq.s32.totalorder %s11, 0
    %p135 = por %p133, %p134
    %p136 = scmp.ne.s32.totalorder %s125, %s128
    %p137 = scmp.eq.s32.totalorder %s16, 3
    %p138 = por %p136, %p137
    %p139 = scmp.ne.s32.totalorder %s128, %s129
    %p140 = scmp.eq.s32.totalorder %s16, 0
    %p141 = por %p139, %p140
    %p142 = scmp.ne.s32.totalorder %s128, %s129
    %p143 = scmp.eq.s32.totalorder %s17, 3
    %p144 = por %p142, %p143
    %p146 = scmp.ne.s32.totalorder %s129, %s145
    %p147 = scmp.eq.s32.totalorder %s17, 0
    %p148 = por %p146, %p147
    %s149 = smul.u32 %s18, 2
    %s150 = sadd.s32 %s149, %s19
    %s151 = smul.u32 %s37, 2
    %s152 = sadd.s32 %s151, %s33
    %s153 = ssub.s32 %s150, %s152
    %p154 = scmp.eq.s32.totalorder %s153, 0
    %s156 = sadd.s32 %s155, 1
    %s157 = scalar_select %p154, %s155, %s156
    %p160 = pneg %p154
    %p161 = scmp.eq.s32.totalorder %s11, 3
    %p162 = por %p160, %p161
    %p163 = scmp.ne.s32.totalorder %s155, %s158
    %p164 = scmp.eq.s32.totalorder %s11, 0
    %p165 = por %p163, %p164
    %p166 = scmp.ne.s32.totalorder %s155, %s158
    %p167 = scmp.eq.s32.totalorder %s16, 3
    %p168 = por %p166, %p167
    %p169 = scmp.ne.s32.totalorder %s158, %s159
    %p170 = scmp.eq.s32.totalorder %s16, 0
    %p171 = por %p169, %p170
    %p172 = scmp.ne.s32.totalorder %s158, %s159
    %p173 = scmp.eq.s32.totalorder %s17, 3
    %p174 = por %p172, %p173
    %p176 = scmp.ne.s32.totalorder %s159, %s175
    %p177 = scmp.eq.s32.totalorder %s17, 0
    %p178 = por %p176, %p177
    %p179 = scmp.le.s32.totalorder 1, %s11
    %p180 = scmp.lt.s32.totalorder %s11, 5
    %p181 = pnand %p179, %p180
    %p182 = pneg %p181
    // Predicated region
    $region9: #{tpu_custom_call.1} parent=5 // pred_check
      _
    $region10: #{tpu_custom_call.1} parent=5 // pred_check_branch
      %184 = sbr.rel (%p181) target = $region12
    $region11: #{tpu_custom_call.1} parent=5 // pred_region
      %s185 = ssub.s32 %s11, 1
      // Predicated region
      $region13: #{tpu_custom_call.1} parent=11 // pred_check
        %p186 = pneg %p51
      $region14: #{tpu_custom_call.1} parent=11 // pred_check_branch
        %188 = sbr.rel (%p186) target = $region16
      $region15: #{tpu_custom_call.1} parent=11 // pred_region
        _
      $region16: #{tpu_custom_call.1} parent=11 // pred_fallthru
        _
    $region12: #{tpu_custom_call.1} parent=5 // pred_fallthru
      _
    %p189 = scmp.lt.s32.totalorder %s11, 4
    // Predicated region
    $region17: #{tpu_custom_call.1} parent=5 // pred_check
      %p190 = pneg %p189
    $region18: #{tpu_custom_call.1} parent=5 // pred_check_branch
      %192 = sbr.rel (%p190) target = $region20
    $region19: #{tpu_custom_call.1} parent=5 // pred_region
      // Predicated region
      $region21: #{tpu_custom_call.1} parent=19 // pred_check
        %p193 = pneg %p75
      $region22: #{tpu_custom_call.1} parent=19 // pred_check_branch
        %195 = sbr.rel (%p193) target = $region24
      $region23: #{tpu_custom_call.1} parent=19 // pred_region
        %s196 = sadd.s32 %s18, %s20
        %p197 = scmp.lt.s32.totalorder %s19, 1
        %s198 = scalar_select %p197, %s19, 1
        %p199 = scmp.lt.s32.totalorder %s196, 1
        %s200 = scalar_select %p199, %s196, 1
        %s201 = smul.addr %s200, 32
        %s202 = smul.addr %s198, 64
        %s203 = sadd.s32 %s201, %s202
        %s204 = smul.addr %s203, 8
        %s205 = scalar_lea.vmem %s1, %s204
        %s206 = sadd.s32 %s18, %s20
      $region24: #{tpu_custom_call.1} parent=19 // pred_fallthru
        _
    $region20: #{tpu_custom_call.1} parent=5 // pred_fallthru
      _
    %p207 = scmp.le.s32.totalorder 1, %s11
    %p208 = scmp.lt.s32.totalorder %s11, 5
    %p209 = pnand %p207, %p208
    %p210 = pneg %p209
    // Predicated region
    $region25: #{tpu_custom_call.1} parent=5 // pred_check
      _
    $region26: #{tpu_custom_call.1} parent=5 // pred_check_branch
      %212 = sbr.rel (%p209) target = $region28
    $region27: #{tpu_custom_call.1} parent=5 // pred_region
      %s213 = ssub.s32 %s11, 1
      %p214 = pneg %p51
      %p215 = pneg %p48
      %s216 = sadd.s32 %s21, %s23
      %p217 = scmp.lt.s32.totalorder %s22, 1
      %s218 = scalar_select %p217, %s22, 1
      %p219 = scmp.lt.s32.totalorder %s216, 1
      %s220 = scalar_select %p219, %s216, 1
      %s221 = smul.addr %s220, 32
      %s222 = smul.addr %s218, 64
      %s223 = sadd.s32 %s221, %s222
      %s224 = smul.addr %s223, 8
      %s225 = scalar_lea.vmem %s1, %s224
      %p226 = pneg %p81
      %p227 = pneg %p78
      %p228 = pneg %p111
      %p229 = pneg %p108
      %s230 = smul.u32 %s21, 2
      %s231 = sadd.s32 %s230, %s22
      %p232 = scmp.lt.s32.totalorder %s231, 3
      %s233 = scalar_select %p232, %s231, 3
      %s234 = scalar_lea.vmem %s2, %s233
      %p235 = pneg %p141
      %p236 = pneg %p138
      %s237 = smul.u32 %s21, 2
      %s238 = sadd.s32 %s237, %s22
      %p239 = scmp.lt.s32.totalorder %s238, 3
      %s240 = scalar_select %p239, %s238, 3
      %s241 = scalar_lea.vmem %s3, %s240
      %p242 = pneg %p171
      %p243 = pneg %p168
      %s244 = smul.u32 %s21, 2
      %s245 = sadd.s32 %s244, %s22
      %p246 = scmp.lt.s32.totalorder %s245, 3
      %s247 = scalar_select %p246, %s245, 3
      %s248 = scalar_lea.vmem %s4, %s247
      %s249 = sadd.s32 %s21, %s23
      %p250 = scmp.lt.s32.totalorder %s22, 1
      %s251 = scalar_select %p250, %s22, 1
      %p252 = scmp.lt.s32.totalorder %s249, 1
      %s253 = scalar_select %p252, %s249, 1
      %s254 = smul.addr %s253, 32
      %s255 = smul.addr %s251, 64
      %s256 = sadd.s32 %s254, %s255
      %s257 = smul.addr %s256, 8
      %s258 = scalar_lea.vmem %s1, %s257
      %s259 = sadd.s32 %s21, %s23
      %s260 = smul.u32 %s21, 2
      %s261 = sadd.s32 %s260, %s22
      %p262 = scmp.lt.s32.totalorder %s261, 3
      %s263 = scalar_select %p262, %s261, 3
      %s264 = scalar_lea.vmem %s2, %s263
      %s265 = smul.u32 %s21, 2
      %s266 = sadd.s32 %s265, %s22
      %s267 = smul.u32 %s21, 2
      %s268 = sadd.s32 %s267, %s22
      %p269 = scmp.lt.s32.totalorder %s268, 3
      %s270 = scalar_select %p269, %s268, 3
      %s271 = scalar_lea.vmem %s3, %s270
      %s272 = smul.u32 %s21, 2
      %s273 = sadd.s32 %s272, %s22
      %s274 = smul.u32 %s21, 2
      %s275 = sadd.s32 %s274, %s22
      %p276 = scmp.lt.s32.totalorder %s275, 3
      %s277 = scalar_select %p276, %s275, 3
      %s278 = scalar_lea.vmem %s4, %s277
      %s279 = smul.u32 %s21, 2
      %s280 = sadd.s32 %s279, %s22
      %p281 = scmp.eq.s32.totalorder %s23, 0
      // Predicated region
      $region29: #{tpu_custom_call.1} parent=27 // pred_check
        %p282 = pneg %p281
      $region30: #{tpu_custom_call.1} parent=27 // pred_check_branch
        %284 = sbr.rel (%p282) target = $region32
      $region31: #{tpu_custom_call.1} parent=27 // pred_region
        %285 = vst [vmem:[#allocation2] sm:$0xff] 0.0
        %286 = vst [vmem:[#allocation2 + $0x8] sm:$0xff] 0.0
        %287 = vst [vmem:[#allocation2 + $0x10] sm:$0xff] 0.0
        %288 = vst [vmem:[#allocation2 + $0x18] sm:$0xff] 0.0
        %289 = vst [vmem:[#allocation2 + $0x20] sm:$0xff] 0.0
        %290 = vst [vmem:[#allocation3] sm:$0xff] 0.0
        %291 = vst [vmem:[#allocation3 + $0x8] sm:$0xff] 0.0
        %292 = vst [vmem:[#allocation3 + $0x10] sm:$0xff] 0.0
        %293 = vst [vmem:[#allocation3 + $0x18] sm:$0xff] 0.0
        %294 = vst [vmem:[#allocation3 + $0x20] sm:$0xff] 0.0
        %295 = vst [vmem:[#allocation4] sm:$0xff] 0.0
        %296 = vst [vmem:[#allocation4 + $0x8] sm:$0xff] 0.0
        %297 = vst [vmem:[#allocation4 + $0x10] sm:$0xff] 0.0
        %298 = vst [vmem:[#allocation4 + $0x18] sm:$0xff] 0.0
        %299 = vst [vmem:[#allocation4 + $0x20] sm:$0xff] 0.0
        %vm300 = vcmask 0
        %301 = vst.msk [vmem:[%s264] sm:$0x1] %vm300, 0.0
        %302 = vst.msk [vmem:[%s271] sm:$0x1] %vm300, 0.0
        %303 = vst.msk [vmem:[%s278] sm:$0x1] %vm300, 0.0
      $region32: #{tpu_custom_call.1} parent=27 // pred_fallthru
        _
      %v304 = vld [vmem:[%s0] sm:$0xff]
      %v305 = vld [vmem:[%s0 + $0x8] sm:$0xff]
      %v306 = vld [vmem:[%s0 + $0x10] sm:$0xff]
      %v307 = vld [vmem:[%s0 + $0x18] sm:$0xff]
      %v308 = vld [vmem:[%s0 + $0x20] sm:$0xff]
      %v309 = vld [vmem:[%s0 + $0x28] sm:$0xff]
      %v310 = vld [vmem:[%s0 + $0x30] sm:$0xff]
      %v311 = vld [vmem:[%s0 + $0x38] sm:$0xff]
      %v312 = vld [vmem:[%s0 + $0x40] sm:$0xff]
      %v313 = vld [vmem:[%s0 + $0x48] sm:$0xff]
      %v314 = vld [vmem:[%s258] sm:$0xff]
      %v315 = vld [vmem:[%s258 + $0x8] sm:$0xff]
      %v316 = vld [vmem:[%s258 + $0x10] sm:$0xff]
      %v317 = vld [vmem:[%s258 + $0x18] sm:$0xff]
      %v318 = vld [vmem:[%s258 + $0x20] sm:$0xff]
      %v319 = vld [vmem:[%s258 + $0x28] sm:$0xff]
      %v320 = vld [vmem:[%s258 + $0x30] sm:$0xff]
      %v321 = vld [vmem:[%s258 + $0x38] sm:$0xff]
      %v322 = vld [vmem:[%s258 + $0x40] sm:$0xff]
      %v323 = vld [vmem:[%s258 + $0x48] sm:$0xff]
      %v324 = vld [vmem:[%s258 + $0x50] sm:$0xff]
      %v325 = vld [vmem:[%s258 + $0x58] sm:$0xff]
      %v326 = vld [vmem:[%s258 + $0x60] sm:$0xff]
      %v327 = vld [vmem:[%s258 + $0x68] sm:$0xff]
      %v328 = vld [vmem:[%s258 + $0x70] sm:$0xff]
      %v329 = vld [vmem:[%s258 + $0x78] sm:$0xff]
      %v330 = vld [vmem:[%s258 + $0x80] sm:$0xff]
      %v331 = vld [vmem:[%s258 + $0x88] sm:$0xff]
      %v332 = vld [vmem:[%s258 + $0x90] sm:$0xff]
      %v333 = vld [vmem:[%s258 + $0x98] sm:$0xff]
      %v334 = vld [vmem:[%s258 + $0xa0] sm:$0xff]
      %v335 = vld [vmem:[%s258 + $0xa8] sm:$0xff]
      %v336 = vld [vmem:[%s258 + $0xb0] sm:$0xff]
      %v337 = vld [vmem:[%s258 + $0xb8] sm:$0xff]
      %v338 = vld [vmem:[%s258 + $0xc0] sm:$0xff]
      %v339 = vld [vmem:[%s258 + $0xc8] sm:$0xff]
      %v340 = vld [vmem:[%s258 + $0xd0] sm:$0xff]
      %v341 = vld [vmem:[%s258 + $0xd8] sm:$0xff]
      %v342 = vld [vmem:[%s258 + $0xe0] sm:$0xff]
      %v343 = vld [vmem:[%s258 + $0xe8] sm:$0xff]
      %v344 = vld [vmem:[%s258 + $0xf0] sm:$0xff]
      %v345 = vld [vmem:[%s258 + $0xf8] sm:$0xff]
      %vm346 = vcmask 523264
      %v348 = vsel %vm346, %v304, 0
      %v351 = vsel %vm346, %v305, 0
      %v354 = vsel %vm346, %v306, 0
      %v357 = vsel %vm346, %v307, 0
      %v360 = vsel %vm346, %v308, 0
      %v363 = vsel %vm346, %v309, 0
      %v366 = vsel %vm346, %v310, 0
      %v369 = vsel %vm346, %v311, 0
      %v372 = vsel %vm346, %v312, 0
      %v375 = vsel %vm346, %v313, 0
      %v378 = vsel %vm346, %v314, 0
      %v381 = vsel %vm346, %v315, 0
      %v384 = vsel %vm346, %v316, 0
      %v387 = vsel %vm346, %v317, 0
      %v390 = vsel %vm346, %v318, 0
      %v393 = vsel %vm346, %v319, 0
      %v396 = vsel %vm346, %v320, 0
      %v399 = vsel %vm346, %v321, 0
      %v402 = vsel %vm346, %v322, 0
      %v405 = vsel %vm346, %v323, 0
      %v408 = vsel %vm346, %v324, 0
      %v411 = vsel %vm346, %v325, 0
      %v414 = vsel %vm346, %v326, 0
      %v417 = vsel %vm346, %v327, 0
      %v420 = vsel %vm346, %v328, 0
      %v423 = vsel %vm346, %v329, 0
      %v426 = vsel %vm346, %v330, 0
      %v429 = vsel %vm346, %v331, 0
      %v432 = vsel %vm346, %v332, 0
      %v435 = vsel %vm346, %v333, 0
      %v438 = vsel %vm346, %v334, 0
      %v441 = vsel %vm346, %v335, 0
      %v444 = vsel %vm346, %v336, 0
      %v447 = vsel %vm346, %v337, 0
      %v450 = vsel %vm346, %v338, 0
      %v453 = vsel %vm346, %v339, 0
      %v456 = vsel %vm346, %v340, 0
      %v459 = vsel %vm346, %v341, 0
      %v462 = vsel %vm346, %v342, 0
      %v465 = vsel %vm346, %v343, 0
      %v468 = vsel %vm346, %v344, 0
      %v471 = vsel %vm346, %v345, 0
      %473 = vmatpush.xpose.msra.mxu0 %v423
      %474 = vmatpush.xpose.msra.mxu0 %v420
      %475 = vmatpush.xpose.msra.mxu0 %v417
      %476 = vmatpush.xpose.msra.mxu0 %v414
      %477 = vmatpush.xpose.msra.mxu0 %v411
      %478 = vmatpush.xpose.msra.mxu0 %v408
      %479 = vmatpush.xpose.msra.mxu0 %v405
      %480 = vmatpush.xpose.msra.mxu0 %v402
      %481 = vmatpush.xpose.msra.mxu0 %v399
      %482 = vmatpush.xpose.msra.mxu0 %v396
      %483 = vmatpush.xpose.msra.mxu0 %v393
      %484 = vmatpush.xpose.msra.mxu0 %v390
      %485 = vmatpush.xpose.msra.mxu0 %v387
      %486 = vmatpush.xpose.msra.mxu0 %v384
      %487 = vmatpush.xpose.msra.mxu0 %v381
      %488 = vmatpush.xpose.msra.mxu0 %v378
      %489 = vmatmul.f32.gmra.mxu0 %v348
      %v490 = vpop.f32.mrf.mxu0
      %v491 = vadd.f32 0.0, %v490
      %492 = vmatmul.f32.gmra.mxu0 %v351
      %v493 = vpop.f32.mrf.mxu0
      %v494 = vadd.f32 0.0, %v493
      %495 = vmatmul.f32.gmra.mxu0 %v354
      %v496 = vpop.f32.mrf.mxu0
      %v497 = vadd.f32 0.0, %v496
      %498 = vmatmul.f32.gmra.mxu0 %v357
      %v499 = vpop.f32.mrf.mxu0
      %v500 = vadd.f32 0.0, %v499
      %501 = vmatmul.f32.gmra.mxu0 %v360
      %v502 = vpop.f32.mrf.mxu0
      %v503 = vadd.f32 0.0, %v502
      %504 = vmatmul.f32.gmra.mxu0 %v363
      %v505 = vpop.f32.mrf.mxu0
      %v506 = vadd.f32 0.0, %v505
      %507 = vmatmul.f32.gmra.mxu0 %v366
      %v508 = vpop.f32.mrf.mxu0
      %v509 = vadd.f32 0.0, %v508
      %510 = vmatmul.f32.gmra.mxu0 %v369
      %v511 = vpop.f32.mrf.mxu0
      %v512 = vadd.f32 0.0, %v511
      %513 = vmatmul.f32.gmra.mxu0 %v372
      %v514 = vpop.f32.mrf.mxu0
      %v515 = vadd.f32 0.0, %v514
      %516 = vmatmul.f32.gmra.mxu0 %v375
      %v517 = vpop.f32.mrf.mxu0
      %v518 = vadd.f32 0.0, %v517
      %519 = vdwg.mxu0
      %520 = vmatpush.xpose.msra.mxu0 %v471
      %521 = vmatpush.xpose.msra.mxu0 %v468
      %522 = vmatpush.xpose.msra.mxu0 %v465
      %523 = vmatpush.xpose.msra.mxu0 %v462
      %524 = vmatpush.xpose.msra.mxu0 %v459
      %525 = vmatpush.xpose.msra.mxu0 %v456
      %526 = vmatpush.xpose.msra.mxu0 %v453
      %527 = vmatpush.xpose.msra.mxu0 %v450
      %528 = vmatpush.xpose.msra.mxu0 %v447
      %529 = vmatpush.xpose.msra.mxu0 %v444
      %530 = vmatpush.xpose.msra.mxu0 %v441
      %531 = vmatpush.xpose.msra.mxu0 %v438
      %532 = vmatpush.xpose.msra.mxu0 %v435
      %533 = vmatpush.xpose.msra.mxu0 %v432
      %534 = vmatpush.xpose.msra.mxu0 %v429
      %535 = vmatpush.xpose.msra.mxu0 %v426
      %536 = vmatmul.f32.gmra.mxu0 %v348
      %v537 = vpop.f32.mrf.mxu0
      %v538 = vadd.f32 0.0, %v537
      %539 = vmatmul.f32.gmra.mxu0 %v351
      %v540 = vpop.f32.mrf.mxu0
      %v541 = vadd.f32 0.0, %v540
      %542 = vmatmul.f32.gmra.mxu0 %v354
      %v543 = vpop.f32.mrf.mxu0
      %v544 = vadd.f32 0.0, %v543
      %545 = vmatmul.f32.gmra.mxu0 %v357
      %v546 = vpop.f32.mrf.mxu0
      %v547 = vadd.f32 0.0, %v546
      %548 = vmatmul.f32.gmra.mxu0 %v360
      %v549 = vpop.f32.mrf.mxu0
      %v550 = vadd.f32 0.0, %v549
      %551 = vmatmul.f32.gmra.mxu0 %v363
      %v552 = vpop.f32.mrf.mxu0
      %v553 = vadd.f32 0.0, %v552
      %554 = vmatmul.f32.gmra.mxu0 %v366
      %v555 = vpop.f32.mrf.mxu0
      %v556 = vadd.f32 0.0, %v555
      %557 = vmatmul.f32.gmra.mxu0 %v369
      %v558 = vpop.f32.mrf.mxu0
      %v559 = vadd.f32 0.0, %v558
      %560 = vmatmul.f32.gmra.mxu0 %v372
      %v561 = vpop.f32.mrf.mxu0
      %v562 = vadd.f32 0.0, %v561
      %563 = vmatmul.f32.gmra.mxu0 %v375
      %v564 = vpop.f32.mrf.mxu0
      %v565 = vadd.f32 0.0, %v564
      %566 = vdwg.mxu0
      %v567 = vmul.f32 %v491, %v491
      %v568 = vmul.f32 %v494, %v494
      %v569 = vmul.f32 %v497, %v497
      %v570 = vmul.f32 %v500, %v500
      %v571 = vmul.f32 %v503, %v503
      %v572 = vmul.f32 %v506, %v506
      %v573 = vmul.f32 %v509, %v509
      %v574 = vmul.f32 %v512, %v512
      %v575 = vmul.f32 %v515, %v515
      %v576 = vmul.f32 %v518, %v518
      %v577 = vadd.f32 %v567, %v572
      %v578 = vadd.f32 %v568, %v573
      %v579 = vadd.f32 %v569, %v574
      %v580 = vadd.f32 %v570, %v575
      %v581 = vadd.f32 %v571, %v576
      %v582 = vrsqrt.pop %v577
      %v583 = vmul.f32 %v582, %v577
      %v584 = vmul.f32 %v583, %v582
      %v585 = vmul.f32 0.5, %v584
      %v586 = vsub.f32 1.5, %v585
      %v587 = vmul.f32 %v582, %v586
      %v588 = vmul.f32 %v577, %v587
      %vm589 = vcmp.eq.f32.partialorder %v577, inf
      %v590 = vsel %vm589, %v577, %v588
      %vm591 = vcmp.eq.f32.partialorder %v577, 0.0
      %v592 = vand.u32 %v577, 2147483648
      %v593 = vsel %vm591, %v592, %v590
      %v594 = vrsqrt.pop %v578
      %v595 = vmul.f32 %v594, %v578
      %v596 = vmul.f32 %v595, %v594
      %v597 = vmul.f32 0.5, %v596
      %v598 = vsub.f32 1.5, %v597
      %v599 = vmul.f32 %v594, %v598
      %v600 = vmul.f32 %v578, %v599
      %vm601 = vcmp.eq.f32.partialorder %v578, inf
      %v602 = vsel %vm601, %v578, %v600
      %vm603 = vcmp.eq.f32.partialorder %v578, 0.0
      %v604 = vand.u32 %v578, 2147483648
      %v605 = vsel %vm603, %v604, %v602
      %v606 = vrsqrt.pop %v579
      %v607 = vmul.f32 %v606, %v579
      %v608 = vmul.f32 %v607, %v606
      %v609 = vmul.f32 0.5, %v608
      %v610 = vsub.f32 1.5, %v609
      %v611 = vmul.f32 %v606, %v610
      %v612 = vmul.f32 %v579, %v611
      %vm613 = vcmp.eq.f32.partialorder %v579, inf
      %v614 = vsel %vm613, %v579, %v612
      %vm615 = vcmp.eq.f32.partialorder %v579, 0.0
      %v616 = vand.u32 %v579, 2147483648
      %v617 = vsel %vm615, %v616, %v614
      %v618 = vrsqrt.pop %v580
      %v619 = vmul.f32 %v618, %v580
      %v620 = vmul.f32 %v619, %v618
      %v621 = vmul.f32 0.5, %v620
      %v622 = vsub.f32 1.5, %v621
      %v623 = vmul.f32 %v618, %v622
      %v624 = vmul.f32 %v580, %v623
      %vm625 = vcmp.eq.f32.partialorder %v580, inf
      %v626 = vsel %vm625, %v580, %v624
      %vm627 = vcmp.eq.f32.partialorder %v580, 0.0
      %v628 = vand.u32 %v580, 2147483648
      %v629 = vsel %vm627, %v628, %v626
      %v630 = vrsqrt.pop %v581
      %v631 = vmul.f32 %v630, %v581
      %v632 = vmul.f32 %v631, %v630
      %v633 = vmul.f32 0.5, %v632
      %v634 = vsub.f32 1.5, %v633
      %v635 = vmul.f32 %v630, %v634
      %v636 = vmul.f32 %v581, %v635
      %vm637 = vcmp.eq.f32.partialorder %v581, inf
      %v638 = vsel %vm637, %v581, %v636
      %vm639 = vcmp.eq.f32.partialorder %v581, 0.0
      %v640 = vand.u32 %v581, 2147483648
      %v641 = vsel %vm639, %v640, %v638
      %v642 = vadd.f32 %v593, 1e-07
      %v643 = vadd.f32 %v605, 1e-07
      %v644 = vadd.f32 %v617, 1e-07
      %v645 = vadd.f32 %v629, 1e-07
      %v646 = vadd.f32 %v641, 1e-07
      %v647 = vmul.f32 %v538, %v538
      %v648 = vmul.f32 %v541, %v541
      %v649 = vmul.f32 %v544, %v544
      %v650 = vmul.f32 %v547, %v547
      %v651 = vmul.f32 %v550, %v550
      %v652 = vmul.f32 %v553, %v553
      %v653 = vmul.f32 %v556, %v556
      %v654 = vmul.f32 %v559, %v559
      %v655 = vmul.f32 %v562, %v562
      %v656 = vmul.f32 %v565, %v565
      %v657 = vadd.f32 %v647, %v652
      %v658 = vadd.f32 %v648, %v653
      %v659 = vadd.f32 %v649, %v654
      %v660 = vadd.f32 %v650, %v655
      %v661 = vadd.f32 %v651, %v656
      %v662 = vrsqrt.pop %v657
      %v663 = vmul.f32 %v662, %v657
      %v664 = vmul.f32 %v663, %v662
      %v665 = vmul.f32 0.5, %v664
      %v666 = vsub.f32 1.5, %v665
      %v667 = vmul.f32 %v662, %v666
      %v668 = vmul.f32 %v657, %v667
      %vm669 = vcmp.eq.f32.partialorder %v657, inf
      %v670 = vsel %vm669, %v657, %v668
      %vm671 = vcmp.eq.f32.partialorder %v657, 0.0
      %v672 = vand.u32 %v657, 2147483648
      %v673 = vsel %vm671, %v672, %v670
      %v674 = vrsqrt.pop %v658
      %v675 = vmul.f32 %v674, %v658
      %v676 = vmul.f32 %v675, %v674
      %v677 = vmul.f32 0.5, %v676
      %v678 = vsub.f32 1.5, %v677
      %v679 = vmul.f32 %v674, %v678
      %v680 = vmul.f32 %v658, %v679
      %vm681 = vcmp.eq.f32.partialorder %v658, inf
      %v682 = vsel %vm681, %v658, %v680
      %vm683 = vcmp.eq.f32.partialorder %v658, 0.0
      %v684 = vand.u32 %v658, 2147483648
      %v685 = vsel %vm683, %v684, %v682
      %v686 = vrsqrt.pop %v659
      %v687 = vmul.f32 %v686, %v659
      %v688 = vmul.f32 %v687, %v686
      %v689 = vmul.f32 0.5, %v688
      %v690 = vsub.f32 1.5, %v689
      %v691 = vmul.f32 %v686, %v690
      %v692 = vmul.f32 %v659, %v691
      %vm693 = vcmp.eq.f32.partialorder %v659, inf
      %v694 = vsel %vm693, %v659, %v692
      %vm695 = vcmp.eq.f32.partialorder %v659, 0.0
      %v696 = vand.u32 %v659, 2147483648
      %v697 = vsel %vm695, %v696, %v694
      %v698 = vrsqrt.pop %v660
      %v699 = vmul.f32 %v698, %v660
      %v700 = vmul.f32 %v699, %v698
      %v701 = vmul.f32 0.5, %v700
      %v702 = vsub.f32 1.5, %v701
      %v703 = vmul.f32 %v698, %v702
      %v704 = vmul.f32 %v660, %v703
      %vm705 = vcmp.eq.f32.partialorder %v660, inf
      %v706 = vsel %vm705, %v660, %v704
      %vm707 = vcmp.eq.f32.partialorder %v660, 0.0
      %v708 = vand.u32 %v660, 2147483648
      %v709 = vsel %vm707, %v708, %v706
      %v710 = vrsqrt.pop %v661
      %v711 = vmul.f32 %v710, %v661
      %v712 = vmul.f32 %v711, %v710
      %v713 = vmul.f32 0.5, %v712
      %v714 = vsub.f32 1.5, %v713
      %v715 = vmul.f32 %v710, %v714
      %v716 = vmul.f32 %v661, %v715
      %vm717 = vcmp.eq.f32.partialorder %v661, inf
      %v718 = vsel %vm717, %v661, %v716
      %vm719 = vcmp.eq.f32.partialorder %v661, 0.0
      %v720 = vand.u32 %v661, 2147483648
      %v721 = vsel %vm719, %v720, %v718
      %v722 = vadd.f32 %v673, 1e-07
      %v723 = vadd.f32 %v685, 1e-07
      %v724 = vadd.f32 %v697, 1e-07
      %v725 = vadd.f32 %v709, 1e-07
      %v726 = vadd.f32 %v721, 1e-07
      %v727 = vsub.f32 %v642, %v722
      %v728 = vsub.f32 %v643, %v723
      %v729 = vsub.f32 %v644, %v724
      %v730 = vsub.f32 %v645, %v725
      %v731 = vsub.f32 %v646, %v726
      %v732 = vadd.f32 %v642, %v722
      %v733 = vadd.f32 %v643, %v723
      %v734 = vadd.f32 %v644, %v724
      %v735 = vadd.f32 %v645, %v725
      %v736 = vadd.f32 %v646, %v726
      %v737 = vlog2.pop %v642
      %v738 = vmul.f32 %v737, 0.6931472
      %v739 = vlog2.pop %v643
      %v740 = vmul.f32 %v739, 0.6931472
      %v741 = vlog2.pop %v644
      %v742 = vmul.f32 %v741, 0.6931472
      %v743 = vlog2.pop %v645
      %v744 = vmul.f32 %v743, 0.6931472
      %v745 = vlog2.pop %v646
      %v746 = vmul.f32 %v745, 0.6931472
      %v747 = vlog2.pop %v722
      %v748 = vmul.f32 %v747, 0.6931472
      %v749 = vlog2.pop %v723
      %v750 = vmul.f32 %v749, 0.6931472
      %v751 = vlog2.pop %v724
      %v752 = vmul.f32 %v751, 0.6931472
      %v753 = vlog2.pop %v725
      %v754 = vmul.f32 %v753, 0.6931472
      %v755 = vlog2.pop %v726
      %v756 = vmul.f32 %v755, 0.6931472
      %v757 = vsub.f32 %v738, %v748
      %v758 = vsub.f32 %v740, %v750
      %v759 = vsub.f32 %v742, %v752
      %v760 = vsub.f32 %v744, %v754
      %v761 = vsub.f32 %v746, %v756
      %v762 = vld [vmem:[#allocation2] sm:$0xff]
      %v763 = vld [vmem:[#allocation2 + $0x8] sm:$0xff]
      %v764 = vld [vmem:[#allocation2 + $0x10] sm:$0xff]
      %v765 = vld [vmem:[#allocation2 + $0x18] sm:$0xff]
      %v766 = vld [vmem:[#allocation2 + $0x20] sm:$0xff]
      %v767 = vmul.f32 %v727, %v727
      %v768 = vmul.f32 %v728, %v728
      %v769 = vmul.f32 %v729, %v729
      %v770 = vmul.f32 %v730, %v730
      %v771 = vmul.f32 %v731, %v731
      %v772 = vadd.f32 %v762, %v767
      %v773 = vadd.f32 %v763, %v768
      %v774 = vadd.f32 %v764, %v769
      %v775 = vadd.f32 %v765, %v770
      %v776 = vadd.f32 %v766, %v771
      %777 = vst [vmem:[#allocation2] sm:$0xff] %v772
      %778 = vst [vmem:[#allocation2 + $0x8] sm:$0xff] %v773
      %779 = vst [vmem:[#allocation2 + $0x10] sm:$0xff] %v774
      %780 = vst [vmem:[#allocation2 + $0x18] sm:$0xff] %v775
      %781 = vst [vmem:[#allocation2 + $0x20] sm:$0xff] %v776
      %v782 = vld [vmem:[#allocation3] sm:$0xff]
      %v783 = vld [vmem:[#allocation3 + $0x8] sm:$0xff]
      %v784 = vld [vmem:[#allocation3 + $0x10] sm:$0xff]
      %v785 = vld [vmem:[#allocation3 + $0x18] sm:$0xff]
      %v786 = vld [vmem:[#allocation3 + $0x20] sm:$0xff]
      %v787 = vmul.f32 %v732, %v732
      %v788 = vmul.f32 %v733, %v733
      %v789 = vmul.f32 %v734, %v734
      %v790 = vmul.f32 %v735, %v735
      %v791 = vmul.f32 %v736, %v736
      %v792 = vadd.f32 %v782, %v787
      %v793 = vadd.f32 %v783, %v788
      %v794 = vadd.f32 %v784, %v789
      %v795 = vadd.f32 %v785, %v790
      %v796 = vadd.f32 %v786, %v791
      %797 = vst [vmem:[#allocation3] sm:$0xff] %v792
      %798 = vst [vmem:[#allocation3 + $0x8] sm:$0xff] %v793
      %799 = vst [vmem:[#allocation3 + $0x10] sm:$0xff] %v794
      %800 = vst [vmem:[#allocation3 + $0x18] sm:$0xff] %v795
      %801 = vst [vmem:[#allocation3 + $0x20] sm:$0xff] %v796
      %v802 = vld [vmem:[#allocation4] sm:$0xff]
      %v803 = vld [vmem:[#allocation4 + $0x8] sm:$0xff]
      %v804 = vld [vmem:[#allocation4 + $0x10] sm:$0xff]
      %v805 = vld [vmem:[#allocation4 + $0x18] sm:$0xff]
      %v806 = vld [vmem:[#allocation4 + $0x20] sm:$0xff]
      %v807 = vand.u32 2147483647, %v757
      %v808 = vand.u32 2147483647, %v758
      %v809 = vand.u32 2147483647, %v759
      %v810 = vand.u32 2147483647, %v760
      %v811 = vand.u32 2147483647, %v761
      %v812 = vadd.f32 %v802, %v807
      %v813 = vadd.f32 %v803, %v808
      %v814 = vadd.f32 %v804, %v809
      %v815 = vadd.f32 %v805, %v810
      %v816 = vadd.f32 %v806, %v811
      %817 = vst [vmem:[#allocation4] sm:$0xff] %v812
      %818 = vst [vmem:[#allocation4 + $0x8] sm:$0xff] %v813
      %819 = vst [vmem:[#allocation4 + $0x10] sm:$0xff] %v814
      %820 = vst [vmem:[#allocation4 + $0x18] sm:$0xff] %v815
      %821 = vst [vmem:[#allocation4 + $0x20] sm:$0xff] %v816
      // Predicated region
      $region33: #{tpu_custom_call.1} parent=27 // pred_check
        %p822 = pneg %p281
      $region34: #{tpu_custom_call.1} parent=27 // pred_check_branch
        %824 = sbr.rel (%p822) target = $region36
      $region35: #{tpu_custom_call.1} parent=27 // pred_region
        %v825 = vld [vmem:[%s264] sm:$0x1]
        %v826 = vld [vmem:[#allocation2] sm:$0xff]
        %v827 = vld [vmem:[#allocation2 + $0x8] sm:$0xff]
        %v828 = vld [vmem:[#allocation2 + $0x10] sm:$0xff]
        %v829 = vld [vmem:[#allocation2 + $0x18] sm:$0xff]
        %v830 = vld [vmem:[#allocation2 + $0x20] sm:$0xff]
        %v831 = vadd.f32 %v826, %v827
        %v832 = vadd.f32 %v831, %v828
        %v833 = vadd.f32 %v832, %v829
        %v834 = vadd.f32 %v833, %v830
        %835 = vadd.xlane.f32.xlu0 %v834
        %v836 = vpop.xlane.xlu0 %835
        %v837 = vrot.slane %v836, 4
        %v838 = vadd.f32 %v836, %v837
        %v839 = vrot.slane %v838, 2
        %v840 = vadd.f32 %v838, %v839
        %v841 = vrot.slane %v840, 1
        %v842 = vadd.f32 %v840, %v841
        %s843 = vtos %v842
        %v844 = vstv %s843
        %v845 = vadd.f32 %v825, %v844
        %vm846 = vcmask 0
        %847 = vst.msk [vmem:[%s264] sm:$0x1] %vm846, %v845
        %v848 = vld [vmem:[%s271] sm:$0x1]
        %v849 = vld [vmem:[#allocation3] sm:$0xff]
        %v850 = vld [vmem:[#allocation3 + $0x8] sm:$0xff]
        %v851 = vld [vmem:[#allocation3 + $0x10] sm:$0xff]
        %v852 = vld [vmem:[#allocation3 + $0x18] sm:$0xff]
        %v853 = vld [vmem:[#allocation3 + $0x20] sm:$0xff]
        %v854 = vadd.f32 %v849, %v850
        %v855 = vadd.f32 %v854, %v851
        %v856 = vadd.f32 %v855, %v852
        %v857 = vadd.f32 %v856, %v853
        %858 = vadd.xlane.f32.xlu0 %v857
        %v859 = vpop.xlane.xlu0 %858
        %v860 = vrot.slane %v859, 4
        %v861 = vadd.f32 %v859, %v860
        %v862 = vrot.slane %v861, 2
        %v863 = vadd.f32 %v861, %v862
        %v864 = vrot.slane %v863, 1
        %v865 = vadd.f32 %v863, %v864
        %s866 = vtos %v865
        %v867 = vstv %s866
        %v868 = vadd.f32 %v848, %v867
        %869 = vst.msk [vmem:[%s271] sm:$0x1] %vm846, %v868
        %v870 = vld [vmem:[%s278] sm:$0x1]
        %v871 = vld [vmem:[#allocation4] sm:$0xff]
        %v872 = vld [vmem:[#allocation4 + $0x8] sm:$0xff]
        %v873 = vld [vmem:[#allocation4 + $0x10] sm:$0xff]
        %v874 = vld [vmem:[#allocation4 + $0x18] sm:$0xff]
        %v875 = vld [vmem:[#allocation4 + $0x20] sm:$0xff]
        %v876 = vadd.f32 %v871, %v872
        %v877 = vadd.f32 %v876, %v873
        %v878 = vadd.f32 %v877, %v874
        %v879 = vadd.f32 %v878, %v875
        %880 = vadd.xlane.f32.xlu0 %v879
        %v881 = vpop.xlane.xlu0 %880
        %v882 = vrot.slane %v881, 4
        %v883 = vadd.f32 %v881, %v882
        %v884 = vrot.slane %v883, 2
        %v885 = vadd.f32 %v883, %v884
        %v886 = vrot.slane %v885, 1
        %v887 = vadd.f32 %v885, %v886
        %s888 = vtos %v887
        %v889 = vstv %s888
        %v890 = vadd.f32 %v870, %v889
        %891 = vst.msk [vmem:[%s278] sm:$0x1] %vm846, %v890
      $region36: #{tpu_custom_call.1} parent=27 // pred_fallthru
        _
      %s892 = smul.u32 %s21, 2
      %s893 = sadd.s32 %s892, %s22
      %p894 = scmp.lt.s32.totalorder %s893, 3
      %s895 = scalar_select %p894, %s893, 3
      %s896 = scalar_lea.vmem %s2, %s895
      %s897 = smul.u32 %s21, 2
      %s898 = sadd.s32 %s897, %s22
      %p899 = scmp.lt.s32.totalorder %s898, 3
      %s900 = scalar_select %p899, %s898, 3
      %s901 = scalar_lea.vmem %s3, %s900
      %s902 = smul.u32 %s21, 2
      %s903 = sadd.s32 %s902, %s22
      %p904 = scmp.lt.s32.totalorder %s903, 3
      %s905 = scalar_select %p904, %s903, 3
      %s906 = scalar_lea.vmem %s4, %s905
      // Predicated region
      $region37: #{tpu_custom_call.1} parent=27 // pred_check
        %p907 = pneg %p108
      $region38: #{tpu_custom_call.1} parent=27 // pred_check_branch
        %909 = sbr.rel (%p907) target = $region40
      $region39: #{tpu_custom_call.1} parent=27 // pred_region
        %s910 = smul.u32 %s21, 2
        %s911 = sadd.s32 %s910, %s22
      $region40: #{tpu_custom_call.1} parent=27 // pred_fallthru
        _
      // Predicated region
      $region41: #{tpu_custom_call.1} parent=27 // pred_check
        %p912 = pneg %p138
      $region42: #{tpu_custom_call.1} parent=27 // pred_check_branch
        %914 = sbr.rel (%p912) target = $region44
      $region43: #{tpu_custom_call.1} parent=27 // pred_region
        %s915 = smul.u32 %s21, 2
        %s916 = sadd.s32 %s915, %s22
      $region44: #{tpu_custom_call.1} parent=27 // pred_fallthru
        _
      // Predicated region
      $region45: #{tpu_custom_call.1} parent=27 // pred_check
        %p917 = pneg %p168
      $region46: #{tpu_custom_call.1} parent=27 // pred_check_branch
        %919 = sbr.rel (%p917) target = $region48
      $region47: #{tpu_custom_call.1} parent=27 // pred_region
        %s920 = smul.u32 %s21, 2
        %s921 = sadd.s32 %s920, %s22
      $region48: #{tpu_custom_call.1} parent=27 // pred_fallthru
        _
    $region28: #{tpu_custom_call.1} parent=5 // pred_fallthru
      _
    %p922 = scmp.le.s32.totalorder 2, %s11
    // Predicated region
    $region49: #{tpu_custom_call.1} parent=5 // pred_check
      %p923 = pneg %p922
    $region50: #{tpu_custom_call.1} parent=5 // pred_check_branch
      %925 = sbr.rel (%p923) target = $region52
    $region51: #{tpu_custom_call.1} parent=5 // pred_region
      %s926 = ssub.s32 %s11, 2
      // Predicated region
      $region53: #{tpu_custom_call.1} parent=51 // pred_check
        %p927 = pneg %p114
      $region54: #{tpu_custom_call.1} parent=51 // pred_check_branch
        %929 = sbr.rel (%p927) target = $region56
      $region55: #{tpu_custom_call.1} parent=51 // pred_region
        %s930 = smul.u32 %s24, 2
        %s931 = sadd.s32 %s930, %s25
        %p932 = scmp.lt.s32.totalorder %s931, 3
        %s933 = scalar_select %p932, %s931, 3
        %s934 = scalar_lea.vmem %s2, %s933
      $region56: #{tpu_custom_call.1} parent=51 // pred_fallthru
        _
      // Predicated region
      $region57: #{tpu_custom_call.1} parent=51 // pred_check
        %p935 = pneg %p144
      $region58: #{tpu_custom_call.1} parent=51 // pred_check_branch
        %937 = sbr.rel (%p935) target = $region60
      $region59: #{tpu_custom_call.1} parent=51 // pred_region
        %s938 = smul.u32 %s24, 2
        %s939 = sadd.s32 %s938, %s25
        %p940 = scmp.lt.s32.totalorder %s939, 3
        %s941 = scalar_select %p940, %s939, 3
        %s942 = scalar_lea.vmem %s3, %s941
      $region60: #{tpu_custom_call.1} parent=51 // pred_fallthru
        _
      // Predicated region
      $region61: #{tpu_custom_call.1} parent=51 // pred_check
        %p943 = pneg %p174
      $region62: #{tpu_custom_call.1} parent=51 // pred_check_branch
        %945 = sbr.rel (%p943) target = $region64
      $region63: #{tpu_custom_call.1} parent=51 // pred_region
        %s946 = smul.u32 %s24, 2
        %s947 = sadd.s32 %s946, %s25
        %p948 = scmp.lt.s32.totalorder %s947, 3
        %s949 = scalar_select %p948, %s947, 3
        %s950 = scalar_lea.vmem %s4, %s949
      $region64: #{tpu_custom_call.1} parent=51 // pred_fallthru
        _
    $region52: #{tpu_custom_call.1} parent=5 // pred_fallthru
      _
  $region6: #{tpu_custom_call.1} parent=0 // loop_footer
    %s15 = sadd.s32 1, %s11
  $region7: #{tpu_custom_call.1} parent=0 // loop_footer_branch
    %10 = sbr.rel target = $region3
  $region8: #{tpu_custom_call.1} parent=0 // loop_exit
    _

</llo_original>
